<compile_context>
chip_gen: v7x
topology: tpu7x:2x2x1
jax: 0.10.0
libtpu: 0.0.40
codegen_flags: <defaults>
</compile_context>

<pallas_src>
import functools

import jax
import jax.numpy as jnp
from jax.experimental import pallas as pl
from jax.experimental.pallas import tpu as pltpu


def _round_up(x, m):
    return (x + m - 1) // m * m


def _plan(bs, feat, output_dim, dtype, k_block_cap=None):
    """Tile sizes and padded dims for the [bs, feat] @ [feat, output_dim] matmul."""
    sublane = 16 if jnp.dtype(dtype) == jnp.bfloat16 else 8

    # M: balanced tiles (avoid padding bs=300 up to 512); split into >=2 tiles
    # when the batch is large enough so v7x megacore has parallel M work.
    m_tiles = max(pl.cdiv(bs, 256), 2 if bs >= 2 * sublane else 1)
    tm = _round_up(pl.cdiv(bs, m_tiles), sublane)
    m_p = _round_up(bs, tm)

    # N: lane-dense (multiple of 128), capped at 256.
    tn = min(_round_up(output_dim, 128), 256)
    n_p = _round_up(output_dim, tn)

    # K: collapse to a single step for moderate feat; otherwise balanced ~2K
    # blocks. Double-buffered f32 blocks at (256, 4096, 256) are ~16.5 MiB.
    k_aligned = _round_up(feat, 128)
    if k_aligned <= 4096:
        tk = k_aligned
    else:
        k_tiles = pl.cdiv(k_aligned, 2048)
        tk = _round_up(pl.cdiv(k_aligned, k_tiles), 128)
    if k_block_cap is not None:
        tk = min(tk, _round_up(k_block_cap, 128))
    k_p = _round_up(feat, tk)
    return tm, tn, tk, m_p, n_p, k_p


def _sigmoid_range(y, y_range):
    """y is f32. Divide goes to the EUP via approx reciprocal (exp already EUP)."""
    low, high = y_range
    return low + (high - low) * pl.reciprocal(1.0 + jnp.exp(-y), approx=True)


def _head_kernel_single_k(x_ref, w_ref, b_ref, o_ref, *, y_range):
    # Single K step: no accumulator scratch, no pl.when phases.
    # x_ref: [TM, K_p]  w_ref: [K_p, TN]  b_ref: [1, TN] f32  o_ref: [TM, TN]
    y = jnp.dot(x_ref[...], w_ref[...], preferred_element_type=jnp.float32)
    y = y + b_ref[...]
    if y_range is not None:
        y = _sigmoid_range(y, y_range)
    o_ref[...] = y.astype(o_ref.dtype)


def _head_kernel_multi_k(x_ref, w_ref, b_ref, o_ref, acc_ref, *, y_range):
    # Multi K step: f32 VMEM accumulator, K is the last ("arbitrary") grid axis.
    k = pl.program_id(2)

    @pl.when(k == 0)
    def _():
        acc_ref[...] = jnp.zeros_like(acc_ref)

    acc_ref[...] += jnp.dot(x_ref[...], w_ref[...],
                            preferred_element_type=jnp.float32)

    @pl.when(k == pl.num_programs(2) - 1)
    def _():
        y = acc_ref[...] + b_ref[...]          # bias add in f32
        if y_range is not None:
            y = _sigmoid_range(y, y_range)
        o_ref[...] = y.astype(o_ref.dtype)


def prepare_regression_head_params(weight, bias, *, param_dtype, k_block_cap=None):
    """One-time parameter prep (do at model load, NOT per forward call).

    weight: [output_dim, feat]  (PyTorch nn.Linear layout)
    bias:   [output_dim]
    param_dtype: REQUIRED; must match the activation dtype used at forward time
                 (use bf16 to halve weight HBM traffic; accumulation stays f32).
    Returns:
      w_t: [K_p, N_p]  transposed weight, zero-padded to tile-aligned dims
      b_p: [1,  N_p]   zero-padded bias kept in float32
    """
    output_dim, feat = weight.shape
    _, _, _, _, n_p, k_p = _plan(1, feat, output_dim, param_dtype, k_block_cap)
    w_t = jnp.pad(weight.T.astype(param_dtype),
                  ((0, k_p - feat), (0, n_p - output_dim)))
    b_p = jnp.pad(bias.astype(jnp.float32),
                  (0, n_p - output_dim)).reshape(1, n_p)
    return w_t, b_p


@functools.partial(jax.jit,
                   static_argnames=("output_dim", "y_range", "k_block_cap"))
def regression_head_forward(x, w_t, b_p, *, output_dim, y_range=None,
                            k_block_cap=None):
    """
    x:   [bs, n_vars, d_model, num_patch]
    w_t: [K_p, N_p]  pre-transposed / padded weight (prepare_regression_head_params)
    b_p: [1,  N_p]   padded f32 bias
    returns [bs, output_dim]
    """
    # TODO(synk): training-mode dropout not implemented (head_dropout is identity at eval).
    bs, n_vars, d_model, _ = x.shape
    feat = n_vars * d_model
    tm, tn, tk, m_p, n_p, k_p = _plan(bs, feat, output_dim, x.dtype, k_block_cap)

    assert w_t.shape == (k_p, n_p) and b_p.shape == (1, n_p), (
        "params not prepared for this (feat, output_dim, k_block_cap): "
        "call prepare_regression_head_params first")
    assert w_t.dtype == x.dtype, (
        f"weight dtype {w_t.dtype} must match activation dtype {x.dtype} "
        "(pass param_dtype=x.dtype to prepare_regression_head_params)")
    assert b_p.dtype == jnp.float32

    # Glue: last-patch slice + flatten + pad to tile-aligned (M_p, K_p).
    # allow_input_fusion lets XLA fold this into the pallas_call operand.
    x_flat = x[:, :, :, -1].reshape(bs, feat)
    x_pad = jnp.pad(x_flat, ((0, m_p - bs), (0, k_p - feat)))

    m_tiles, n_tiles, k_steps = m_p // tm, n_p // tn, k_p // tk

    if k_steps == 1:
        # Fast path: single K block, 2-D fully-parallel grid, no accumulator.
        kernel = functools.partial(_head_kernel_single_k, y_range=y_range)
        out = pl.pallas_call(
            kernel,
            out_shape=jax.ShapeDtypeStruct((m_p, n_p), x.dtype),
            grid_spec=pltpu.PrefetchScalarGridSpec(
                num_scalar_prefetch=0,
                grid=(m_tiles, n_tiles),
                in_specs=[
                    pl.BlockSpec((tm, k_p), lambda m, n: (m, 0)),   # activations
                    pl.BlockSpec((k_p, tn), lambda m, n: (0, n)),   # weight
                    pl.BlockSpec((1, tn), lambda m, n: (0, n)),     # f32 bias
                ],
                out_specs=pl.BlockSpec((tm, tn), lambda m, n: (m, n)),
            ),
            compiler_params=pltpu.CompilerParams(
                dimension_semantics=("parallel", "parallel"),
                allow_input_fusion=[True, True, True],
                vmem_limit_bytes=32 * 1024 * 1024,
            ),
        )(x_pad, w_t, b_p)
    else:
        # Large-K fallback: accumulator over the innermost "arbitrary" K axis,
        # weight stream triple-buffered (its DMA is the critical path at small M).
        kernel = functools.partial(_head_kernel_multi_k, y_range=y_range)
        out = pl.pallas_call(
            kernel,
            out_shape=jax.ShapeDtypeStruct((m_p, n_p), x.dtype),
            grid_spec=pltpu.PrefetchScalarGridSpec(
                num_scalar_prefetch=0,
                grid=(m_tiles, n_tiles, k_steps),
                in_specs=[
                    pl.BlockSpec((tm, tk), lambda m, n, k: (m, k)),
                    pl.BlockSpec((tk, tn), lambda m, n, k: (k, n),
                                 pipeline_mode=pl.Buffered(3)),
                    pl.BlockSpec((1, tn), lambda m, n, k: (0, n)),
                ],
                out_specs=pl.BlockSpec((tm, tn), lambda m, n, k: (m, n)),
                scratch_shapes=[pltpu.VMEM((tm, tn), jnp.float32)],
            ),
            compiler_params=pltpu.CompilerParams(
                dimension_semantics=("parallel", "parallel", "arbitrary"),
                allow_input_fusion=[True, True, True],
                vmem_limit_bytes=32 * 1024 * 1024,
            ),
        )(x_pad, w_t, b_p)

    return out[:bs, :output_dim]


def _reference(x, weight, bias, y_range=None):
    bs = x.shape[0]
    x_flat = x[:, :, :, -1].reshape(bs, -1)
    y = jnp.dot(x_flat, weight.T, precision=jax.lax.Precision.HIGHEST) + bias
    if y_range is not None:
        low, high = y_range
        y = jax.nn.sigmoid(y) * (high - low) + low
    return y


if __name__ == "__main__":
    key = jax.random.PRNGKey(0)

    def make_case(k, bs, n_vars, d_model, num_patch, output_dim, dtype):
        kx, kw, kb = jax.random.split(k, 3)
        x = jax.random.normal(kx, (bs, n_vars, d_model, num_patch), jnp.float32)
        fan_in = n_vars * d_model
        bound = 1.0 / (fan_in ** 0.5)
        w = jax.random.uniform(kw, (output_dim, fan_in), jnp.float32, -bound, bound)
        b = jax.random.uniform(kb, (output_dim,), jnp.float32, -bound, bound)
        return x.astype(dtype), w, b

    k1, k2, k3 = jax.random.split(key, 3)

    # Case 1 & 2: f32, single-K-step fast path (plain head + sigmoid-range head).
    bs, n_vars, d_model, num_patch, output_dim = 2, 4, 32, 8, 16
    x, weight, bias = make_case(k1, bs, n_vars, d_model, num_patch, output_dim,
                                jnp.float32)
    w_t, b_p = prepare_regression_head_params(weight, bias, param_dtype=x.dtype)

    y = jax.block_until_ready(
        regression_head_forward(x, w_t, b_p, output_dim=output_dim))
    y_ref = _reference(x, weight, bias)
    assert y.shape == (bs, output_dim)
    # Tolerance covers MXU bf16-pass rounding of f32 matmuls; real indexing/bias
    # bugs produce O(1) errors and are still caught.
    assert jnp.allclose(y, y_ref, atol=1e-2, rtol=1e-2), "mismatch: linear head"

    y_range = (-1.0, 3.0)
    y2 = jax.block_until_ready(
        regression_head_forward(x, w_t, b_p, output_dim=output_dim,
                                y_range=y_range))
    y2_ref = _reference(x, weight, bias, y_range=y_range)
    # Slightly looser: approx-reciprocal sigmoid in the epilogue.
    assert jnp.allclose(y2, y2_ref, atol=1e-2, rtol=1e-2), "mismatch: sigmoid-range"

    # Case 3: force the multi-K-step accumulator path (feat=384, 3 K blocks of 128).
    bs3, nv3, dm3, np3, od3 = 4, 3, 128, 6, 10
    x3, w3, b3 = make_case(k2, bs3, nv3, dm3, np3, od3, jnp.float32)
    w3_t, b3_p = prepare_regression_head_params(w3, b3, param_dtype=x3.dtype,
                                                k_block_cap=128)
    y3 = jax.block_until_ready(
        regression_head_forward(x3, w3_t, b3_p, output_dim=od3, k_block_cap=128))
    y3_ref = _reference(x3, w3, b3)
    assert y3.shape == (bs3, od3)
    assert jnp.allclose(y3, y3_ref, atol=1e-2, rtol=1e-2), "mismatch: multi-K path"

    # Case 4: bf16 activations + bf16 weights (f32 accumulate / bias / epilogue).
    xb, wb, bb = make_case(k3, 2, 4, 32, 8, 16, jnp.bfloat16)
    wb_bf16 = wb.astype(jnp.bfloat16)
    wb_t, bb_p = prepare_regression_head_params(wb_bf16, bb,
                                                param_dtype=jnp.bfloat16)
    yb = jax.block_until_ready(
        regression_head_forward(xb, wb_t, bb_p, output_dim=16))
    yb_ref = _reference(xb.astype(jnp.float32), wb_bf16.astype(jnp.float32), bb)
    assert jnp.allclose(yb.astype(jnp.float32), yb_ref, atol=3e-2, rtol=3e-2), \
        "mismatch: bf16 head"

    print("KERNEL_OK")
</pallas_src>

<mosaic_0001>
module attributes {stable_mosaic.version = 11 : i64} {
  func.func @_head_kernel_single_k(%arg0: i32, %arg1: i32, %arg2: memref<8x128xf32, #tpu.memory_space<vmem>>, %arg3: memref<128x128xf32, #tpu.memory_space<vmem>>, %arg4: memref<1x128xf32, #tpu.memory_space<vmem>>, %arg5: memref<8x128xf32, #tpu.memory_space<vmem>>) attributes {dimension_semantics = [#tpu.dimension_semantics<parallel>, #tpu.dimension_semantics<parallel>], iteration_bounds = array<i64: 1, 1>, scalar_prefetch = 0 : i64, scratch_operands = 0 : i64, tpu.core_type = #tpu.core_type<tc>, window_params = [{transform_indices = @transform_0, window_bounds = array<i64: 8, 128>}, {transform_indices = @transform_1, window_bounds = array<i64: 128, 128>}, {transform_indices = @transform_2, window_bounds = array<i64: 1, 128>}, {transform_indices = @transform_3, window_bounds = array<i64: 8, 128>}]} {
    %c0 = arith.constant 0 : index
    %c0_0 = arith.constant 0 : index
    %0 = vector.load %arg2[%c0, %c0_0] : memref<8x128xf32, #tpu.memory_space<vmem>>, vector<8x128xf32>
    %c0_1 = arith.constant 0 : index
    %c0_2 = arith.constant 0 : index
    %1 = vector.load %arg3[%c0_1, %c0_2] : memref<128x128xf32, #tpu.memory_space<vmem>>, vector<128x128xf32>
    %cst = arith.constant dense<0.000000e+00> : vector<8x128xf32>
    %2 = tpu.matmul %0, %1, %cst {dimension_numbers = #tpu.dot_dimension_numbers<[1], [0], [0], [1], [0, 0, 1, 1], [], []>} : vector<8x128xf32>, vector<128x128xf32>, vector<8x128xf32> -> vector<8x128xf32>
    %c0_3 = arith.constant 0 : index
    %c0_4 = arith.constant 0 : index
    %3 = vector.load %arg4[%c0_3, %c0_4] : memref<1x128xf32, #tpu.memory_space<vmem>>, vector<1x128xf32>
    %4 = vector.broadcast %3 : vector<1x128xf32> to vector<8x128xf32>
    %5 = arith.addf %2, %4 : vector<8x128xf32>
    %c0_5 = arith.constant 0 : index
    %c0_6 = arith.constant 0 : index
    %6 = vector.load %arg5[%c0_5, %c0_6] : memref<8x128xf32, #tpu.memory_space<vmem>>, vector<8x128xf32>
    tpu.vector_store %arg5[%c0_5, %c0_6], %5 {strides = array<i32>} : memref<8x128xf32, #tpu.memory_space<vmem>>, vector<8x128xf32>,
    return
  }
  func.func @transform_0(%arg0: i32, %arg1: i32) -> (i32, i32) {
    %c0_i32 = arith.constant 0 : i32
    %c0_i32_0 = arith.constant 0 : i32
    return %arg0, %c0_i32 : i32, i32
  }
  func.func @transform_1(%arg0: i32, %arg1: i32) -> (i32, i32) {
    %c0_i32 = arith.constant 0 : i32
    %c0_i32_0 = arith.constant 0 : i32
    return %c0_i32, %arg1 : i32, i32
  }
  func.func @transform_2(%arg0: i32, %arg1: i32) -> (i32, i32) {
    %c0_i32 = arith.constant 0 : i32
    %c0_i32_0 = arith.constant 0 : i32
    return %c0_i32, %arg1 : i32, i32
  }
  func.func @transform_3(%arg0: i32, %arg1: i32) -> (i32, i32) {
    %c0_i32 = arith.constant 0 : i32
    return %arg0, %arg1 : i32, i32
  }
}

</mosaic_0001>

<llo_original>
// kernel: squeeze.1
$region0: #{squeeze.1}
  %s0 = inlined_call_operand.vmem [shape: f32[2,4,32], index: 0, kind: input, shape index: {}]
  %s1 = inlined_call_operand.vmem [shape: f32[2,128], index: 1, kind: output, shape index: {}]
  $region1: #{squeeze.1} parent=0
    #allocation0 [shape = 'u8[4096]{0}', space=vmem, size = 0x1000, scoped, tag = 'scoped mem for output reshape']
    #allocation1 [shape = 'u8[8192]{0}', space=vmem, size = 0x2000, scoped, tag = 'scoped mem for input reshape']
    %s3 = sshllo.u32 0, 4
    %s4 = scalar_lea.vmem %s0, 4
    %v5 = vld [vmem:[%s4] sm:%s3]
    %s6 = scalar_lea.vmem [#allocation1], 8
    %7 = vst [vmem:[%s6] sm:%s3] %v5
    %v8 = vld [vmem:[%s0] sm:%s3]
    %9 = vst [vmem:[#allocation1] sm:%s3] %v8
    %s10 = smov 3
    %v11 = vld [vmem:[#allocation1] ss:$8 sm:%s10]
    %vm12 = vcmask 261120
    %13 = vst.msk [vmem:[#allocation0] sm:$0x3] %vm12, %v11
    %s14 = scalar_lea.vmem [#allocation1], 3
    %s15 = smov 3
    %v16 = vld [vmem:[%s14] ss:$8 sm:%s15]
    %17 = vrot.lane.b32.xlu0 %v16, 96
    %v18 = vpop.permute.xlu0 %17
    %vm19 = vcmask 1048320
    %20 = vst.msk [vmem:[#allocation0] sm:$0x3] %vm19, %v18
    %s21 = scalar_lea.vmem [#allocation1], 2
    %s22 = smov 3
    %v23 = vld [vmem:[%s21] ss:$8 sm:%s22]
    %24 = vrot.lane.b32.xlu0 %v23, 64
    %v25 = vpop.permute.xlu0 %24
    %vm26 = vcmask 785920
    %27 = vst.msk [vmem:[#allocation0] sm:$0x3] %vm26, %v25
    %s28 = scalar_lea.vmem [#allocation1], 1
    %s29 = smov 3
    %v30 = vld [vmem:[%s28] ss:$8 sm:%s29]
    %31 = vrot.lane.b32.xlu0 %v30, 32
    %v32 = vpop.permute.xlu0 %31
    %vm33 = vcmask 523520
    %34 = vst.msk [vmem:[#allocation0] sm:$0x3] %vm33, %v32
    %s36 = sshllo.u32 0, 2
    %v38 = vld [vmem:[#allocation0] sm:%s36]
    %s39 = sshllo.u32 0, 2
    %40 = vst [vmem:[%s1] sm:%s39] %v38

// kernel: regression_head_forward.2
$region0: #{regression_head_forward.2}
  #allocation0 [shape = 'u32[]', space=smem, size = 0x4, offset = 0x4, fixed_abs, tag = 'smem constant byte address 0x4 - core index']
  #allocation1 [shape = 'u32[144,128]{1,0:T(1,128)}', space=vmem, size = 0x12000, scoped, tag = 'internal scratch']
  #allocation2 [shape = 'u32[2048]{0}', space=vmem, size = 0x2000, scoped, tag = 'scoped memory for regression_head_forward.2']
  #allocation3 [shape = 'u32[2048]{0}', space=vmem, size = 0x2000, scoped, tag = 'scoped memory for regression_head_forward.2']
  #allocation4 [shape = 'u32[2048]{0}', space=vmem, size = 0x2000, scoped, tag = 'scoped memory for regression_head_forward.2']
  #allocation5 [shape = 'u32[2048]{0}', space=vmem, size = 0x2000, scoped, tag = 'scoped memory for regression_head_forward.2']
  #allocation6 [shape = 'u32[2048]{0}', space=vmem, size = 0x2000, scoped, tag = 'scoped memory for regression_head_forward.2']
  %s0 = inlined_call_operand.hbm [shape: f32[128,128], index: 0, kind: input, shape index: {}]
  %s1 = inlined_call_operand.vmem [shape: f32[1,128], index: 1, kind: input, shape index: {}]
  %s2 = inlined_call_operand.vmem [shape: f32[2,128], index: 2, kind: input, shape index: {}]
  %s3 = inlined_call_operand.<no memory space> [shape: f32[], index: 3, kind: input, shape index: {}]
  %s4 = inlined_call_operand.vmem [shape: f32[8,128], index: 4, kind: output, shape index: {}]
  %s5 = sld [smem:[#allocation0]]
  $region26: #{regression_head_forward.2} parent=0
    _
  %s7 = ssub.s32 1, %s5
  %s8 = scalar_select 0, %s7, %s5
  %v9 = vstv %s3
  $region1: #{regression_head_forward.2} parent=0
    #allocation7 [shape = 'u8[65536]{0}', space=vmem, size = 0x10000, scoped, tag = 'input window, operand 1, single buffered']
    #allocation8 [shape = 's32[1]{0}', space=sflag, size = 0x4, scoped, tag = 'scoped memory for regression_head_forward.2']
    #allocation9 [shape = 'u8[4096]{0}', space=vmem, size = 0x1000, dematerialized = true, scoped, tag = 'FusionAdapter Buffer %fusion.1 = f32[8,128]{1,0:T(8,128)} fusion(%param_2.1, %param_3), kind=kLoop, calls=%fused_computation.1.clone, metadata={op_name="jit(regression_head_forward)/jit(_pad)/pad" stack_frame_id=8}']
    %10 = vsyncpa [#allocation8], 0
    // Predicated region
    $region2: #{regression_head_forward.2} parent=1 // pred_check
      _
    $region3: #{regression_head_forward.2} parent=1 // pred_check_branch
      %12 = sbr.rel (0) target = $region5
    $region4: #{regression_head_forward.2} parent=1 // pred_region
      _
    $region5: #{regression_head_forward.2} parent=1 // pred_fallthru
      _
    // Predicated region
    $region6: #{regression_head_forward.2} parent=1 // pred_check
      _
    $region7: #{regression_head_forward.2} parent=1 // pred_check_branch
      %14 = sbr.rel (0) target = $region9
    $region8: #{regression_head_forward.2} parent=1 // pred_region
      %s16 = ssub.s32 2048, 2048
      %17 = vsyncadd [#allocation8], %s16
      %s18 = sshll.u32 [#allocation7], 4
      %s19 = int_to_ptr.vmem [resolvable:$true] %s18
      %24 = dma.hbm_to_vmem [thread:$0]  %s0, 2048, %s19, [#allocation8], 128, 128, 8
    $region9: #{regression_head_forward.2} parent=1 // pred_fallthru
      _
    // Predicated region
    $region10: #{regression_head_forward.2} parent=1 // pred_check
      _
    $region11: #{regression_head_forward.2} parent=1 // pred_check_branch
      %26 = sbr.rel (0) target = $region13
    $region12: #{regression_head_forward.2} parent=1 // pred_region
      _
    $region13: #{regression_head_forward.2} parent=1 // pred_fallthru
      _
    // Predicated region
    $region14: #{regression_head_forward.2} parent=1 // pred_check
      _
    $region15: #{regression_head_forward.2} parent=1 // pred_check_branch
      %28 = sbr.rel (0) target = $region17
    $region16: #{regression_head_forward.2} parent=1 // pred_region
      %29 = dma.done [#allocation8], 2048
    $region17: #{regression_head_forward.2} parent=1 // pred_fallthru
      _
    %v30 = vld [vmem:[%s2] sm:$0x3]
    %v31 = vlaneseq
    %v32 = vshrl.u32 %v31, 7
    %vm34 = vcmp.lt.s32.totalorder %v32, 2
    %v35 = vsel %vm34, %v30, %v9
    %37 = vst [vmem:[#allocation9] sm:$0xff] %v35
    %v38 = vld [vmem:[#allocation9] sm:$0xff]
    %v39 = vld [vmem:[#allocation7] sm:$0xff]
    %v40 = vld [vmem:[#allocation7 + $0x8] sm:$0xff]
    %v41 = vld [vmem:[#allocation7 + $0x10] sm:$0xff]
    %v42 = vld [vmem:[#allocation7 + $0x18] sm:$0xff]
    %v43 = vld [vmem:[#allocation7 + $0x20] sm:$0xff]
    %v44 = vld [vmem:[#allocation7 + $0x28] sm:$0xff]
    %v45 = vld [vmem:[#allocation7 + $0x30] sm:$0xff]
    %v46 = vld [vmem:[#allocation7 + $0x38] sm:$0xff]
    %v47 = vld [vmem:[#allocation7 + $0x40] sm:$0xff]
    %v48 = vld [vmem:[#allocation7 + $0x48] sm:$0xff]
    %v49 = vld [vmem:[#allocation7 + $0x50] sm:$0xff]
    %v50 = vld [vmem:[#allocation7 + $0x58] sm:$0xff]
    %v51 = vld [vmem:[#allocation7 + $0x60] sm:$0xff]
    %v52 = vld [vmem:[#allocation7 + $0x68] sm:$0xff]
    %v53 = vld [vmem:[#allocation7 + $0x70] sm:$0xff]
    %v54 = vld [vmem:[#allocation7 + $0x78] sm:$0xff]
    %v55 = vld [vmem:[%s1] sm:$0x1]
    %v57 = vlaneseq
    %v58 = vshrl.u32 %v57, 7
    %v59 = vsub.s32 0, %v58
    %v60 = vrot.slane %v55, %v59
    %62 = vmatprep.subr.mxu0 0.0
    %63 = vmatpush1.msra.mxu0 %v39
    %64 = vmatprep.subr.mxu0 0.0
    %65 = vmatpush1.msra.mxu0 %v40
    %66 = vmatprep.subr.mxu0 0.0
    %67 = vmatpush1.msra.mxu0 %v41
    %68 = vmatprep.subr.mxu0 0.0
    %69 = vmatpush1.msra.mxu0 %v42
    %70 = vmatprep.subr.mxu0 0.0
    %71 = vmatpush1.msra.mxu0 %v43
    %72 = vmatprep.subr.mxu0 0.0
    %73 = vmatpush1.msra.mxu0 %v44
    %74 = vmatprep.subr.mxu0 0.0
    %75 = vmatpush1.msra.mxu0 %v45
    %76 = vmatprep.subr.mxu0 0.0
    %77 = vmatpush1.msra.mxu0 %v46
    %78 = vmatprep.subr.mxu0 0.0
    %79 = vmatpush1.msra.mxu0 %v47
    %80 = vmatprep.subr.mxu0 0.0
    %81 = vmatpush1.msra.mxu0 %v48
    %82 = vmatprep.subr.mxu0 0.0
    %83 = vmatpush1.msra.mxu0 %v49
    %84 = vmatprep.subr.mxu0 0.0
    %85 = vmatpush1.msra.mxu0 %v50
    %86 = vmatprep.subr.mxu0 0.0
    %87 = vmatpush1.msra.mxu0 %v51
    %88 = vmatprep.subr.mxu0 0.0
    %89 = vmatpush1.msra.mxu0 %v52
    %90 = vmatprep.subr.mxu0 0.0
    %91 = vmatpush1.msra.mxu0 %v53
    %92 = vmatprep.subr.mxu0 0.0
    %93 = vmatpush1.msra.mxu0 %v54
    %94 = vmatprep.subr.mxu0 0.0
    %95 = vmatpush1.msra.mxu0 0.0
    %96 = vmatprep.subr.mxu0 0.0
    %97 = vmatpush1.msra.mxu0 0.0
    %98 = vmatprep.subr.mxu0 0.0
    %99 = vmatpush1.msra.mxu0 0.0
    %100 = vmatprep.subr.mxu0 0.0
    %101 = vmatpush1.msra.mxu0 0.0
    %102 = vmatprep.subr.mxu0 0.0
    %103 = vmatpush1.msra.mxu0 0.0
    %104 = vmatprep.subr.mxu0 0.0
    %105 = vmatpush1.msra.mxu0 0.0
    %106 = vmatprep.subr.mxu0 0.0
    %107 = vmatpush1.msra.mxu0 0.0
    %108 = vmatprep.subr.mxu0 0.0
    %109 = vmatpush1.msra.mxu0 0.0
    %110 = vmatprep.subr.mxu0 0.0
    %111 = vmatpush1.msra.mxu0 0.0
    %112 = vmatprep.subr.mxu0 0.0
    %113 = vmatpush1.msra.mxu0 0.0
    %114 = vmatprep.subr.mxu0 0.0
    %115 = vmatpush1.msra.mxu0 0.0
    %116 = vmatprep.subr.mxu0 0.0
    %117 = vmatpush1.msra.mxu0 0.0
    %118 = vmatprep.subr.mxu0 0.0
    %119 = vmatpush1.msra.mxu0 0.0
    %120 = vmatprep.subr.mxu0 0.0
    %121 = vmatpush1.msra.mxu0 0.0
    %122 = vmatprep.subr.mxu0 0.0
    %123 = vmatpush1.msra.mxu0 0.0
    %124 = vmatprep.subr.mxu0 0.0
    %125 = vmatpush1.msra.mxu0 0.0
    %126 = vmatprep.mubr.f32.mxu0 0.0
    %127 = vmatmul.mubr.f32.gmra.mrb[0].mxu0 %v38
    %v128 = vpop.f32.mrb[0].mxu0
    %v129 = vadd.f32 %v60, %v128
    %v130 = vpop.f32.mrb[0].mxu0
    %131 = vdwg.mxu0
    %132 = vst [vmem:[%s4] sm:$0xff] %v129
    // Predicated region
    $region18: #{regression_head_forward.2} parent=1 // pred_check
      _
    $region19: #{regression_head_forward.2} parent=1 // pred_check_branch
      %134 = sbr.rel (0) target = $region21
    $region20: #{regression_head_forward.2} parent=1 // pred_region
      _
    $region21: #{regression_head_forward.2} parent=1 // pred_fallthru
      _
    // Predicated region
    $region22: #{regression_head_forward.2} parent=1 // pred_check
      _
    $region23: #{regression_head_forward.2} parent=1 // pred_check_branch
      %136 = sbr.rel (0) target = $region25
    $region24: #{regression_head_forward.2} parent=1 // pred_region
      _
    $region25: #{regression_head_forward.2} parent=1 // pred_fallthru
      _
    %137 = vsyncpa [#allocation8], 1

</llo_original>
